<compile_context>
chip_gen: v7x
topology: tpu7x:2x2x1
jax: 0.10.0
libtpu: 0.0.40
codegen_flags: <defaults>
</compile_context>

<pallas_src>
import functools

import jax
import jax.numpy as jnp
from jax.experimental import pallas as pl
from jax.experimental.pallas import tpu as pltpu


def _crnn_lstm_kernel(xp_ref, wih_ref, whh_ref, b_ref, out_ref):
    """Fused input-projection + single-layer LSTM recurrence.

    xp_ref  : (S*B, F)  pooled input, seq-major rows (row = t*B + b)
    wih_ref : (F, 4H)   input->gates weight, columns ordered [i, f, o, g]
    whh_ref : (H, 4H)   hidden->gates weight, columns ordered [i, f, o, g]
    b_ref   : (1, 4H)   combined bias (b_ih + b_hh), reordered the same way
    out_ref : (B, S*H)  flattened hidden states (Flatten layout)
    """
    SB, _ = xp_ref.shape
    H4 = wih_ref.shape[1]
    H = H4 // 4
    B = out_ref.shape[0]
    S = SB // B

    # ---- hoisted input projection: one MXU matmul with M = S*B ----
    gx = jnp.dot(xp_ref[...], wih_ref[...],
                 preferred_element_type=jnp.float32) + b_ref[...]   # (S*B, 4H)

    whh = whh_ref[...]

    h = jnp.zeros((B, H), jnp.float32)
    c = jnp.zeros((B, H), jnp.float32)
    hs = []

    # ---- recurrence: fully unrolled (S is a small static constant) ----
    for t in range(S):
        gates = gx[t * B:(t + 1) * B, :] + jnp.dot(
            h, whh, preferred_element_type=jnp.float32)             # (B, 4H)

        # gate order after wrapper reorder: [i, f, o | g]
        sig = jax.nn.sigmoid(gates[:, 0:3 * H])     # one full-width EUP push
        g_g = jnp.tanh(gates[:, 3 * H:4 * H])       # one EUP push
        i_g = sig[:, 0:H]
        f_g = sig[:, H:2 * H]
        o_g = sig[:, 2 * H:3 * H]

        c = f_g * c + i_g * g_g
        h = o_g * jnp.tanh(c)
        hs.append(h)

    # single lane-dense store (B, S*H): h_t occupies lanes [t*H, (t+1)*H)
    out_ref[...] = jnp.concatenate(hs, axis=1)


def _reorder_gates_cols(w, H):
    """Permute last-axis gate blocks from PyTorch [i, f, g, o] to [i, f, o, g]."""
    return jnp.concatenate(
        [w[..., 0:2 * H], w[..., 3 * H:4 * H], w[..., 2 * H:3 * H]], axis=-1)


def _rnn_b_forward_impl(x, params):
    """Forward pass of RNN_b. x: (B, 1, input_size, T) float32."""
    W_ih, W_hh, b_ih, b_hh = params          # (4H,F), (4H,H), (4H,), (4H,)
    H4 = W_ih.shape[0]
    H = H4 // 4

    B = x.shape[0]
    D = x.shape[2]                           # input_size
    T = x.shape[3]
    S, F = T // 2, D // 2

    # --- glue (fused under jit): squeeze + permute + 2x2 maxpool ---
    out = jnp.transpose(x[:, 0], (0, 2, 1))                        # (B, T, D)
    pooled = out[:, :2 * S, :2 * F].reshape(B, S, 2, F, 2)
    pooled = jnp.max(pooled, axis=(2, 4))                          # (B, S, F)
    # seq-major (S*B, F) slab: no in-kernel reshape / relayout needed.
    xp = jnp.transpose(pooled, (1, 0, 2)).reshape(S * B, F).astype(jnp.float32)

    # weights: transpose + reorder gate columns to [i, f, o, g]
    wih_t = _reorder_gates_cols(jnp.transpose(W_ih).astype(jnp.float32), H)  # (F, 4H)
    whh_t = _reorder_gates_cols(jnp.transpose(W_hh).astype(jnp.float32), H)  # (H, 4H)
    bias = _reorder_gates_cols(
        (b_ih + b_hh).astype(jnp.float32), H).reshape(1, H4)                 # (1, 4H)

    vmem_spec = pl.BlockSpec(memory_space=pltpu.MemorySpace.VMEM)

    # output already in Flatten layout (B, S*H): no post-kernel transpose.
    return pl.pallas_call(
        _crnn_lstm_kernel,
        out_shape=jax.ShapeDtypeStruct((B, S * H), jnp.float32),
        in_specs=[vmem_spec] * 4,
        out_specs=vmem_spec,
    )(xp, wih_t, whh_t, bias)


rnn_b_forward = jax.jit(_rnn_b_forward_impl)


def _reference_forward(x, params):
    """Pure-JAX reference mirroring the PyTorch module (for validation)."""
    W_ih, W_hh, b_ih, b_hh = params
    H = W_hh.shape[1]
    B, _, D, T = x.shape
    out = jnp.transpose(x[:, 0], (0, 2, 1))                       # (B, T, D)
    S, F = T // 2, D // 2
    out = out[:, :2 * S, :2 * F].reshape(B, S, 2, F, 2)
    pooled = jnp.max(out, axis=(2, 4))                            # (B, S, F)

    h = jnp.zeros((B, H), jnp.float32)
    c = jnp.zeros((B, H), jnp.float32)
    outs = []
    for t in range(S):
        gates = pooled[:, t] @ W_ih.T + h @ W_hh.T + b_ih + b_hh
        i = jax.nn.sigmoid(gates[:, 0:H])
        f = jax.nn.sigmoid(gates[:, H:2 * H])
        g = jnp.tanh(gates[:, 2 * H:3 * H])
        o = jax.nn.sigmoid(gates[:, 3 * H:4 * H])
        c = f * c + i * g
        h = o * jnp.tanh(c)
        outs.append(h)
    return jnp.stack(outs, axis=1).reshape(B, S * H)


def make_params(key, input_size, hidden_size):
    """Deterministic synthetic LSTM parameters (PyTorch-shaped)."""
    F = input_size // 2
    H = hidden_size
    k1, k2, k3, k4 = jax.random.split(key, 4)
    scale = 1.0 / jnp.sqrt(H)
    W_ih = jax.random.uniform(k1, (4 * H, F), jnp.float32, -scale, scale)
    W_hh = jax.random.uniform(k2, (4 * H, H), jnp.float32, -scale, scale)
    b_ih = jax.random.uniform(k3, (4 * H,), jnp.float32, -scale, scale)
    b_hh = jax.random.uniform(k4, (4 * H,), jnp.float32, -scale, scale)
    return W_ih, W_hh, b_ih, b_hh


if __name__ == "__main__":
    key = jax.random.PRNGKey(0)
    kx, kp = jax.random.split(key)

    B, C, INPUT_SIZE, T = 2, 1, 16, 16     # x: (B, 1, input_size, T)
    HIDDEN = 32                            # 4H = 128 -> one full MXU lane tile

    x = jax.random.normal(kx, (B, C, INPUT_SIZE, T), jnp.float32)
    params = make_params(kp, INPUT_SIZE, HIDDEN)

    out = jax.block_until_ready(rnn_b_forward(x, params))

    ref = jax.block_until_ready(_reference_forward(x, params))
    assert out.shape == (B, (T // 2) * HIDDEN), out.shape
    assert jnp.allclose(out, ref, rtol=1e-4, atol=1e-4), "mismatch vs reference"

    print("KERNEL_OK")
</pallas_src>

<mosaic_0001>
module attributes {stable_mosaic.version = 11 : i64} {
  func.func @_crnn_lstm_kernel(%arg0: memref<16x8xf32, #tpu.memory_space<vmem>>, %arg1: memref<8x128xf32, #tpu.memory_space<vmem>>, %arg2: memref<32x128xf32, #tpu.memory_space<vmem>>, %arg3: memref<1x128xf32, #tpu.memory_space<vmem>>, %arg4: memref<2x256xf32, #tpu.memory_space<vmem>>) attributes {dimension_semantics = [], scalar_prefetch = 0 : i64, scratch_operands = 0 : i64, tpu.core_type = #tpu.core_type<tc>} {
    %c0 = arith.constant 0 : index
    %c0_0 = arith.constant 0 : index
    %0 = vector.load %arg0[%c0, %c0_0] : memref<16x8xf32, #tpu.memory_space<vmem>>, vector<16x8xf32>
    %c0_1 = arith.constant 0 : index
    %c0_2 = arith.constant 0 : index
    %1 = vector.load %arg1[%c0_1, %c0_2] : memref<8x128xf32, #tpu.memory_space<vmem>>, vector<8x128xf32>
    %cst = arith.constant dense<0.000000e+00> : vector<16x128xf32>
    %2 = tpu.matmul %0, %1, %cst {dimension_numbers = #tpu.dot_dimension_numbers<[1], [0], [0], [1], [0, 0, 1, 1], [], []>} : vector<16x8xf32>, vector<8x128xf32>, vector<16x128xf32> -> vector<16x128xf32>
    %c0_3 = arith.constant 0 : index
    %c0_4 = arith.constant 0 : index
    %3 = vector.load %arg3[%c0_3, %c0_4] : memref<1x128xf32, #tpu.memory_space<vmem>>, vector<1x128xf32>
    %4 = vector.broadcast %3 : vector<1x128xf32> to vector<16x128xf32>
    %5 = arith.addf %2, %4 : vector<16x128xf32>
    %c0_5 = arith.constant 0 : index
    %c0_6 = arith.constant 0 : index
    %6 = vector.load %arg2[%c0_5, %c0_6] : memref<32x128xf32, #tpu.memory_space<vmem>>, vector<32x128xf32>
    %cst_7 = arith.constant 0.000000e+00 : f32
    %7 = vector.broadcast %cst_7 : f32 to vector<2x32xf32>
    %cst_8 = arith.constant 0.000000e+00 : f32
    %8 = vector.broadcast %cst_8 : f32 to vector<2x32xf32>
    %9 = vector.extract_strided_slice %5 {offsets = [0, 0], sizes = [2, 128], strides = [1, 1]} : vector<16x128xf32> to vector<2x128xf32>
    %cst_9 = arith.constant dense<0.000000e+00> : vector<2x128xf32>
    %10 = tpu.matmul %7, %6, %cst_9 {dimension_numbers = #tpu.dot_dimension_numbers<[1], [0], [0], [1], [0, 0, 1, 1], [], []>} : vector<2x32xf32>, vector<32x128xf32>, vector<2x128xf32> -> vector<2x128xf32>
    %11 = arith.addf %9, %10 : vector<2x128xf32>
    %12 = vector.extract_strided_slice %11 {offsets = [0, 0], sizes = [2, 96], strides = [1, 1]} : vector<2x128xf32> to vector<2x96xf32>
    %13 = arith.negf %12 : vector<2x96xf32>
    %14 = math.exp %13 : vector<2x96xf32>
    %cst_10 = arith.constant 1.000000e+00 : f32
    %15 = vector.broadcast %cst_10 : f32 to vector<2x96xf32>
    %16 = arith.addf %15, %14 : vector<2x96xf32>
    %17 = arith.divf %15, %16 : vector<2x96xf32>
    %18 = vector.extract_strided_slice %11 {offsets = [0, 96], sizes = [2, 32], strides = [1, 1]} : vector<2x128xf32> to vector<2x32xf32>
    %19 = math.tanh %18 : vector<2x32xf32>
    %20 = vector.extract_strided_slice %17 {offsets = [0, 0], sizes = [2, 32], strides = [1, 1]} : vector<2x96xf32> to vector<2x32xf32>
    %21 = vector.extract_strided_slice %17 {offsets = [0, 32], sizes = [2, 32], strides = [1, 1]} : vector<2x96xf32> to vector<2x32xf32>
    %22 = vector.extract_strided_slice %17 {offsets = [0, 64], sizes = [2, 32], strides = [1, 1]} : vector<2x96xf32> to vector<2x32xf32>
    %23 = arith.mulf %21, %8 : vector<2x32xf32>
    %24 = arith.mulf %20, %19 : vector<2x32xf32>
    %25 = arith.addf %23, %24 : vector<2x32xf32>
    %26 = math.tanh %25 : vector<2x32xf32>
    %27 = arith.mulf %22, %26 : vector<2x32xf32>
    %28 = vector.extract_strided_slice %5 {offsets = [2, 0], sizes = [2, 128], strides = [1, 1]} : vector<16x128xf32> to vector<2x128xf32>
    %cst_11 = arith.constant dense<0.000000e+00> : vector<2x128xf32>
    %29 = tpu.matmul %27, %6, %cst_11 {dimension_numbers = #tpu.dot_dimension_numbers<[1], [0], [0], [1], [0, 0, 1, 1], [], []>} : vector<2x32xf32>, vector<32x128xf32>, vector<2x128xf32> -> vector<2x128xf32>
    %30 = arith.addf %28, %29 : vector<2x128xf32>
    %31 = vector.extract_strided_slice %30 {offsets = [0, 0], sizes = [2, 96], strides = [1, 1]} : vector<2x128xf32> to vector<2x96xf32>
    %32 = arith.negf %31 : vector<2x96xf32>
    %33 = math.exp %32 : vector<2x96xf32>
    %cst_12 = arith.constant 1.000000e+00 : f32
    %34 = vector.broadcast %cst_12 : f32 to vector<2x96xf32>
    %35 = arith.addf %34, %33 : vector<2x96xf32>
    %36 = arith.divf %34, %35 : vector<2x96xf32>
    %37 = vector.extract_strided_slice %30 {offsets = [0, 96], sizes = [2, 32], strides = [1, 1]} : vector<2x128xf32> to vector<2x32xf32>
    %38 = math.tanh %37 : vector<2x32xf32>
    %39 = vector.extract_strided_slice %36 {offsets = [0, 0], sizes = [2, 32], strides = [1, 1]} : vector<2x96xf32> to vector<2x32xf32>
    %40 = vector.extract_strided_slice %36 {offsets = [0, 32], sizes = [2, 32], strides = [1, 1]} : vector<2x96xf32> to vector<2x32xf32>
    %41 = vector.extract_strided_slice %36 {offsets = [0, 64], sizes = [2, 32], strides = [1, 1]} : vector<2x96xf32> to vector<2x32xf32>
    %42 = arith.mulf %40, %25 : vector<2x32xf32>
    %43 = arith.mulf %39, %38 : vector<2x32xf32>
    %44 = arith.addf %42, %43 : vector<2x32xf32>
    %45 = math.tanh %44 : vector<2x32xf32>
    %46 = arith.mulf %41, %45 : vector<2x32xf32>
    %47 = vector.extract_strided_slice %5 {offsets = [4, 0], sizes = [2, 128], strides = [1, 1]} : vector<16x128xf32> to vector<2x128xf32>
    %cst_13 = arith.constant dense<0.000000e+00> : vector<2x128xf32>
    %48 = tpu.matmul %46, %6, %cst_13 {dimension_numbers = #tpu.dot_dimension_numbers<[1], [0], [0], [1], [0, 0, 1, 1], [], []>} : vector<2x32xf32>, vector<32x128xf32>, vector<2x128xf32> -> vector<2x128xf32>
    %49 = arith.addf %47, %48 : vector<2x128xf32>
    %50 = vector.extract_strided_slice %49 {offsets = [0, 0], sizes = [2, 96], strides = [1, 1]} : vector<2x128xf32> to vector<2x96xf32>
    %51 = arith.negf %50 : vector<2x96xf32>
    %52 = math.exp %51 : vector<2x96xf32>
    %cst_14 = arith.constant 1.000000e+00 : f32
    %53 = vector.broadcast %cst_14 : f32 to vector<2x96xf32>
    %54 = arith.addf %53, %52 : vector<2x96xf32>
    %55 = arith.divf %53, %54 : vector<2x96xf32>
    %56 = vector.extract_strided_slice %49 {offsets = [0, 96], sizes = [2, 32], strides = [1, 1]} : vector<2x128xf32> to vector<2x32xf32>
    %57 = math.tanh %56 : vector<2x32xf32>
    %58 = vector.extract_strided_slice %55 {offsets = [0, 0], sizes = [2, 32], strides = [1, 1]} : vector<2x96xf32> to vector<2x32xf32>
    %59 = vector.extract_strided_slice %55 {offsets = [0, 32], sizes = [2, 32], strides = [1, 1]} : vector<2x96xf32> to vector<2x32xf32>
    %60 = vector.extract_strided_slice %55 {offsets = [0, 64], sizes = [2, 32], strides = [1, 1]} : vector<2x96xf32> to vector<2x32xf32>
    %61 = arith.mulf %59, %44 : vector<2x32xf32>
    %62 = arith.mulf %58, %57 : vector<2x32xf32>
    %63 = arith.addf %61, %62 : vector<2x32xf32>
    %64 = math.tanh %63 : vector<2x32xf32>
    %65 = arith.mulf %60, %64 : vector<2x32xf32>
    %66 = vector.extract_strided_slice %5 {offsets = [6, 0], sizes = [2, 128], strides = [1, 1]} : vector<16x128xf32> to vector<2x128xf32>
    %cst_15 = arith.constant dense<0.000000e+00> : vector<2x128xf32>
    %67 = tpu.matmul %65, %6, %cst_15 {dimension_numbers = #tpu.dot_dimension_numbers<[1], [0], [0], [1], [0, 0, 1, 1], [], []>} : vector<2x32xf32>, vector<32x128xf32>, vector<2x128xf32> -> vector<2x128xf32>
    %68 = arith.addf %66, %67 : vector<2x128xf32>
    %69 = vector.extract_strided_slice %68 {offsets = [0, 0], sizes = [2, 96], strides = [1, 1]} : vector<2x128xf32> to vector<2x96xf32>
    %70 = arith.negf %69 : vector<2x96xf32>
    %71 = math.exp %70 : vector<2x96xf32>
    %cst_16 = arith.constant 1.000000e+00 : f32
    %72 = vector.broadcast %cst_16 : f32 to vector<2x96xf32>
    %73 = arith.addf %72, %71 : vector<2x96xf32>
    %74 = arith.divf %72, %73 : vector<2x96xf32>
    %75 = vector.extract_strided_slice %68 {offsets = [0, 96], sizes = [2, 32], strides = [1, 1]} : vector<2x128xf32> to vector<2x32xf32>
    %76 = math.tanh %75 : vector<2x32xf32>
    %77 = vector.extract_strided_slice %74 {offsets = [0, 0], sizes = [2, 32], strides = [1, 1]} : vector<2x96xf32> to vector<2x32xf32>
    %78 = vector.extract_strided_slice %74 {offsets = [0, 32], sizes = [2, 32], strides = [1, 1]} : vector<2x96xf32> to vector<2x32xf32>
    %79 = vector.extract_strided_slice %74 {offsets = [0, 64], sizes = [2, 32], strides = [1, 1]} : vector<2x96xf32> to vector<2x32xf32>
    %80 = arith.mulf %78, %63 : vector<2x32xf32>
    %81 = arith.mulf %77, %76 : vector<2x32xf32>
    %82 = arith.addf %80, %81 : vector<2x32xf32>
    %83 = math.tanh %82 : vector<2x32xf32>
    %84 = arith.mulf %79, %83 : vector<2x32xf32>
    %85 = vector.extract_strided_slice %5 {offsets = [8, 0], sizes = [2, 128], strides = [1, 1]} : vector<16x128xf32> to vector<2x128xf32>
    %cst_17 = arith.constant dense<0.000000e+00> : vector<2x128xf32>
    %86 = tpu.matmul %84, %6, %cst_17 {dimension_numbers = #tpu.dot_dimension_numbers<[1], [0], [0], [1], [0, 0, 1, 1], [], []>} : vector<2x32xf32>, vector<32x128xf32>, vector<2x128xf32> -> vector<2x128xf32>
    %87 = arith.addf %85, %86 : vector<2x128xf32>
    %88 = vector.extract_strided_slice %87 {offsets = [0, 0], sizes = [2, 96], strides = [1, 1]} : vector<2x128xf32> to vector<2x96xf32>
    %89 = arith.negf %88 : vector<2x96xf32>
    %90 = math.exp %89 : vector<2x96xf32>
    %cst_18 = arith.constant 1.000000e+00 : f32
    %91 = vector.broadcast %cst_18 : f32 to vector<2x96xf32>
    %92 = arith.addf %91, %90 : vector<2x96xf32>
    %93 = arith.divf %91, %92 : vector<2x96xf32>
    %94 = vector.extract_strided_slice %87 {offsets = [0, 96], sizes = [2, 32], strides = [1, 1]} : vector<2x128xf32> to vector<2x32xf32>
    %95 = math.tanh %94 : vector<2x32xf32>
    %96 = vector.extract_strided_slice %93 {offsets = [0, 0], sizes = [2, 32], strides = [1, 1]} : vector<2x96xf32> to vector<2x32xf32>
    %97 = vector.extract_strided_slice %93 {offsets = [0, 32], sizes = [2, 32], strides = [1, 1]} : vector<2x96xf32> to vector<2x32xf32>
    %98 = vector.extract_strided_slice %93 {offsets = [0, 64], sizes = [2, 32], strides = [1, 1]} : vector<2x96xf32> to vector<2x32xf32>
    %99 = arith.mulf %97, %82 : vector<2x32xf32>
    %100 = arith.mulf %96, %95 : vector<2x32xf32>
    %101 = arith.addf %99, %100 : vector<2x32xf32>
    %102 = math.tanh %101 : vector<2x32xf32>
    %103 = arith.mulf %98, %102 : vector<2x32xf32>
    %104 = vector.extract_strided_slice %5 {offsets = [10, 0], sizes = [2, 128], strides = [1, 1]} : vector<16x128xf32> to vector<2x128xf32>
    %cst_19 = arith.constant dense<0.000000e+00> : vector<2x128xf32>
    %105 = tpu.matmul %103, %6, %cst_19 {dimension_numbers = #tpu.dot_dimension_numbers<[1], [0], [0], [1], [0, 0, 1, 1], [], []>} : vector<2x32xf32>, vector<32x128xf32>, vector<2x128xf32> -> vector<2x128xf32>
    %106 = arith.addf %104, %105 : vector<2x128xf32>
    %107 = vector.extract_strided_slice %106 {offsets = [0, 0], sizes = [2, 96], strides = [1, 1]} : vector<2x128xf32> to vector<2x96xf32>
    %108 = arith.negf %107 : vector<2x96xf32>
    %109 = math.exp %108 : vector<2x96xf32>
    %cst_20 = arith.constant 1.000000e+00 : f32
    %110 = vector.broadcast %cst_20 : f32 to vector<2x96xf32>
    %111 = arith.addf %110, %109 : vector<2x96xf32>
    %112 = arith.divf %110, %111 : vector<2x96xf32>
    %113 = vector.extract_strided_slice %106 {offsets = [0, 96], sizes = [2, 32], strides = [1, 1]} : vector<2x128xf32> to vector<2x32xf32>
    %114 = math.tanh %113 : vector<2x32xf32>
    %115 = vector.extract_strided_slice %112 {offsets = [0, 0], sizes = [2, 32], strides = [1, 1]} : vector<2x96xf32> to vector<2x32xf32>
    %116 = vector.extract_strided_slice %112 {offsets = [0, 32], sizes = [2, 32], strides = [1, 1]} : vector<2x96xf32> to vector<2x32xf32>
    %117 = vector.extract_strided_slice %112 {offsets = [0, 64], sizes = [2, 32], strides = [1, 1]} : vector<2x96xf32> to vector<2x32xf32>
    %118 = arith.mulf %116, %101 : vector<2x32xf32>
    %119 = arith.mulf %115, %114 : vector<2x32xf32>
    %120 = arith.addf %118, %119 : vector<2x32xf32>
    %121 = math.tanh %120 : vector<2x32xf32>
    %122 = arith.mulf %117, %121 : vector<2x32xf32>
    %123 = vector.extract_strided_slice %5 {offsets = [12, 0], sizes = [2, 128], strides = [1, 1]} : vector<16x128xf32> to vector<2x128xf32>
    %cst_21 = arith.constant dense<0.000000e+00> : vector<2x128xf32>
    %124 = tpu.matmul %122, %6, %cst_21 {dimension_numbers = #tpu.dot_dimension_numbers<[1], [0], [0], [1], [0, 0, 1, 1], [], []>} : vector<2x32xf32>, vector<32x128xf32>, vector<2x128xf32> -> vector<2x128xf32>
    %125 = arith.addf %123, %124 : vector<2x128xf32>
    %126 = vector.extract_strided_slice %125 {offsets = [0, 0], sizes = [2, 96], strides = [1, 1]} : vector<2x128xf32> to vector<2x96xf32>
    %127 = arith.negf %126 : vector<2x96xf32>
    %128 = math.exp %127 : vector<2x96xf32>
    %cst_22 = arith.constant 1.000000e+00 : f32
    %129 = vector.broadcast %cst_22 : f32 to vector<2x96xf32>
    %130 = arith.addf %129, %128 : vector<2x96xf32>
    %131 = arith.divf %129, %130 : vector<2x96xf32>
    %132 = vector.extract_strided_slice %125 {offsets = [0, 96], sizes = [2, 32], strides = [1, 1]} : vector<2x128xf32> to vector<2x32xf32>
    %133 = math.tanh %132 : vector<2x32xf32>
    %134 = vector.extract_strided_slice %131 {offsets = [0, 0], sizes = [2, 32], strides = [1, 1]} : vector<2x96xf32> to vector<2x32xf32>
    %135 = vector.extract_strided_slice %131 {offsets = [0, 32], sizes = [2, 32], strides = [1, 1]} : vector<2x96xf32> to vector<2x32xf32>
    %136 = vector.extract_strided_slice %131 {offsets = [0, 64], sizes = [2, 32], strides = [1, 1]} : vector<2x96xf32> to vector<2x32xf32>
    %137 = arith.mulf %135, %120 : vector<2x32xf32>
    %138 = arith.mulf %134, %133 : vector<2x32xf32>
    %139 = arith.addf %137, %138 : vector<2x32xf32>
    %140 = math.tanh %139 : vector<2x32xf32>
    %141 = arith.mulf %136, %140 : vector<2x32xf32>
    %142 = vector.extract_strided_slice %5 {offsets = [14, 0], sizes = [2, 128], strides = [1, 1]} : vector<16x128xf32> to vector<2x128xf32>
    %cst_23 = arith.constant dense<0.000000e+00> : vector<2x128xf32>
    %143 = tpu.matmul %141, %6, %cst_23 {dimension_numbers = #tpu.dot_dimension_numbers<[1], [0], [0], [1], [0, 0, 1, 1], [], []>} : vector<2x32xf32>, vector<32x128xf32>, vector<2x128xf32> -> vector<2x128xf32>
    %144 = arith.addf %142, %143 : vector<2x128xf32>
    %145 = vector.extract_strided_slice %144 {offsets = [0, 0], sizes = [2, 96], strides = [1, 1]} : vector<2x128xf32> to vector<2x96xf32>
    %146 = arith.negf %145 : vector<2x96xf32>
    %147 = math.exp %146 : vector<2x96xf32>
    %cst_24 = arith.constant 1.000000e+00 : f32
    %148 = vector.broadcast %cst_24 : f32 to vector<2x96xf32>
    %149 = arith.addf %148, %147 : vector<2x96xf32>
    %150 = arith.divf %148, %149 : vector<2x96xf32>
    %151 = vector.extract_strided_slice %144 {offsets = [0, 96], sizes = [2, 32], strides = [1, 1]} : vector<2x128xf32> to vector<2x32xf32>
    %152 = math.tanh %151 : vector<2x32xf32>
    %153 = vector.extract_strided_slice %150 {offsets = [0, 0], sizes = [2, 32], strides = [1, 1]} : vector<2x96xf32> to vector<2x32xf32>
    %154 = vector.extract_strided_slice %150 {offsets = [0, 32], sizes = [2, 32], strides = [1, 1]} : vector<2x96xf32> to vector<2x32xf32>
    %155 = vector.extract_strided_slice %150 {offsets = [0, 64], sizes = [2, 32], strides = [1, 1]} : vector<2x96xf32> to vector<2x32xf32>
    %156 = arith.mulf %154, %139 : vector<2x32xf32>
    %157 = arith.mulf %153, %152 : vector<2x32xf32>
    %158 = arith.addf %156, %157 : vector<2x32xf32>
    %159 = math.tanh %158 : vector<2x32xf32>
    %160 = arith.mulf %155, %159 : vector<2x32xf32>
    %161 = tpu.concatenate %27, %46, %65, %84, %103, %122, %141, %160 in 1 : vector<2x32xf32>, vector<2x32xf32>, vector<2x32xf32>, vector<2x32xf32>, vector<2x32xf32>, vector<2x32xf32>, vector<2x32xf32>, vector<2x32xf32> -> vector<2x256xf32>
    %c0_25 = arith.constant 0 : index
    %c0_26 = arith.constant 0 : index
    %162 = vector.load %arg4[%c0_25, %c0_26] : memref<2x256xf32, #tpu.memory_space<vmem>>, vector<2x256xf32>
    tpu.vector_store %arg4[%c0_25, %c0_26], %161 {strides = array<i32>} : memref<2x256xf32, #tpu.memory_space<vmem>>, vector<2x256xf32>,
    return
  }
}

</mosaic_0001>

<llo_original>
// kernel: _rnn_b_forward_impl.1
$region0: #{_rnn_b_forward_impl.1}
  #allocation0 [shape = 'u32[]', space=smem, size = 0x4, offset = 0x4, fixed_abs, tag = 'smem constant byte address 0x4 - core index']
  #allocation1 [shape = 'u32[144,128]{1,0:T(1,128)}', space=vmem, size = 0x12000, scoped, tag = 'internal scratch']
  %s0 = inlined_call_operand.vmem [shape: f32[16,8], index: 0, kind: input, shape index: {}]
  %s1 = inlined_call_operand.vmem [shape: f32[8,128], index: 1, kind: input, shape index: {}]
  %s2 = inlined_call_operand.vmem [shape: f32[32,128], index: 2, kind: input, shape index: {}]
  %s3 = inlined_call_operand.vmem [shape: f32[1,128], index: 3, kind: input, shape index: {}]
  %s4 = inlined_call_operand.hbm [shape: f32[2,256], index: 4, kind: output, shape index: {}]
  %s5 = sld [smem:[#allocation0]]
  $region26: #{_rnn_b_forward_impl.1} parent=0
    _
  %s7 = ssub.s32 1, %s5
  %s8 = scalar_select 0, %s7, %s5
  $region1: #{_rnn_b_forward_impl.1} parent=0
    #allocation2 [shape = 'u8[2048]{0}', space=vmem, size = 0x800, scoped, tag = 'output window, operand 0, single buffered']
    #allocation3 [shape = 's32[1]{0}', space=sflag, size = 0x4, scoped, tag = 'scoped memory for _rnn_b_forward_impl.1']
    %9 = vsyncpa [#allocation3], 0
    // Predicated region
    $region2: #{_rnn_b_forward_impl.1} parent=1 // pred_check
      _
    $region3: #{_rnn_b_forward_impl.1} parent=1 // pred_check_branch
      %11 = sbr.rel (0) target = $region5
    $region4: #{_rnn_b_forward_impl.1} parent=1 // pred_region
      _
    $region5: #{_rnn_b_forward_impl.1} parent=1 // pred_fallthru
      _
    // Predicated region
    $region6: #{_rnn_b_forward_impl.1} parent=1 // pred_check
      _
    $region7: #{_rnn_b_forward_impl.1} parent=1 // pred_check_branch
      %13 = sbr.rel (0) target = $region9
    $region8: #{_rnn_b_forward_impl.1} parent=1 // pred_region
      _
    $region9: #{_rnn_b_forward_impl.1} parent=1 // pred_fallthru
      _
    // Predicated region
    $region10: #{_rnn_b_forward_impl.1} parent=1 // pred_check
      _
    $region11: #{_rnn_b_forward_impl.1} parent=1 // pred_check_branch
      %15 = sbr.rel (0) target = $region13
    $region12: #{_rnn_b_forward_impl.1} parent=1 // pred_region
      _
    $region13: #{_rnn_b_forward_impl.1} parent=1 // pred_fallthru
      _
    // Predicated region
    $region14: #{_rnn_b_forward_impl.1} parent=1 // pred_check
      _
    $region15: #{_rnn_b_forward_impl.1} parent=1 // pred_check_branch
      %17 = sbr.rel (0) target = $region17
    $region16: #{_rnn_b_forward_impl.1} parent=1 // pred_region
      _
    $region17: #{_rnn_b_forward_impl.1} parent=1 // pred_fallthru
      _
    %v18 = vld [vmem:[%s0] sm:$0xff]
    %v19 = vld [vmem:[%s0 + $0x8] sm:$0xff]
    %v20 = vld [vmem:[%s1] sm:$0xff]
    %v21 = vld [vmem:[%s3] sm:$0x1]
    %v23 = vlaneseq
    %v24 = vshrl.u32 %v23, 7
    %v25 = vsub.s32 0, %v24
    %v26 = vrot.slane %v21, %v25
    %vm28 = vcmask 64512
    %v30 = vsel %vm28, %v18, 0
    %v33 = vsel %vm28, %v19, 0
    %35 = vmatprep.subr.mxu0 0.0
    %36 = vmatpush1.msra.mxu0 %v20
    %37 = vmatprep.subr.mxu0 0.0
    %38 = vmatpush1.msra.mxu0 0.0
    %39 = vmatprep.subr.mxu0 0.0
    %40 = vmatpush1.msra.mxu0 0.0
    %41 = vmatprep.subr.mxu0 0.0
    %42 = vmatpush1.msra.mxu0 0.0
    %43 = vmatprep.subr.mxu0 0.0
    %44 = vmatpush1.msra.mxu0 0.0
    %45 = vmatprep.subr.mxu0 0.0
    %46 = vmatpush1.msra.mxu0 0.0
    %47 = vmatprep.subr.mxu0 0.0
    %48 = vmatpush1.msra.mxu0 0.0
    %49 = vmatprep.subr.mxu0 0.0
    %50 = vmatpush1.msra.mxu0 0.0
    %51 = vmatprep.subr.mxu0 0.0
    %52 = vmatpush1.msra.mxu0 0.0
    %53 = vmatprep.subr.mxu0 0.0
    %54 = vmatpush1.msra.mxu0 0.0
    %55 = vmatprep.subr.mxu0 0.0
    %56 = vmatpush1.msra.mxu0 0.0
    %57 = vmatprep.subr.mxu0 0.0
    %58 = vmatpush1.msra.mxu0 0.0
    %59 = vmatprep.subr.mxu0 0.0
    %60 = vmatpush1.msra.mxu0 0.0
    %61 = vmatprep.subr.mxu0 0.0
    %62 = vmatpush1.msra.mxu0 0.0
    %63 = vmatprep.subr.mxu0 0.0
    %64 = vmatpush1.msra.mxu0 0.0
    %65 = vmatprep.subr.mxu0 0.0
    %66 = vmatpush1.msra.mxu0 0.0
    %67 = vmatprep.subr.mxu0 0.0
    %68 = vmatpush1.msra.mxu0 0.0
    %69 = vmatprep.subr.mxu0 0.0
    %70 = vmatpush1.msra.mxu0 0.0
    %71 = vmatprep.subr.mxu0 0.0
    %72 = vmatpush1.msra.mxu0 0.0
    %73 = vmatprep.subr.mxu0 0.0
    %74 = vmatpush1.msra.mxu0 0.0
    %75 = vmatprep.subr.mxu0 0.0
    %76 = vmatpush1.msra.mxu0 0.0
    %77 = vmatprep.subr.mxu0 0.0
    %78 = vmatpush1.msra.mxu0 0.0
    %79 = vmatprep.subr.mxu0 0.0
    %80 = vmatpush1.msra.mxu0 0.0
    %81 = vmatprep.subr.mxu0 0.0
    %82 = vmatpush1.msra.mxu0 0.0
    %83 = vmatprep.subr.mxu0 0.0
    %84 = vmatpush1.msra.mxu0 0.0
    %85 = vmatprep.subr.mxu0 0.0
    %86 = vmatpush1.msra.mxu0 0.0
    %87 = vmatprep.subr.mxu0 0.0
    %88 = vmatpush1.msra.mxu0 0.0
    %89 = vmatprep.subr.mxu0 0.0
    %90 = vmatpush1.msra.mxu0 0.0
    %91 = vmatprep.subr.mxu0 0.0
    %92 = vmatpush1.msra.mxu0 0.0
    %93 = vmatprep.subr.mxu0 0.0
    %94 = vmatpush1.msra.mxu0 0.0
    %95 = vmatprep.subr.mxu0 0.0
    %96 = vmatpush1.msra.mxu0 0.0
    %97 = vmatprep.subr.mxu0 0.0
    %98 = vmatpush1.msra.mxu0 0.0
    %99 = vmatprep.mubr.f32.mxu0 0.0
    %100 = vmatmul.mubr.f32.gmra.mrb[0].mxu0 %v30
    %v101 = vpop.f32.mrb[0].mxu0
    %v102 = vadd.f32 %v26, %v101
    %v103 = vpop.f32.mrb[0].mxu0
    %104 = vmatprep.mubr.f32.mxu0 0.0
    %105 = vmatmul.mubr.f32.gmra.mrb[0].mxu0 %v33
    %v106 = vpop.f32.mrb[0].mxu0
    %v107 = vadd.f32 %v26, %v106
    %v108 = vpop.f32.mrb[0].mxu0
    %109 = vdwg.mxu0
    %v110 = vld [vmem:[%s2] sm:$0xff]
    %v111 = vld [vmem:[%s2 + $0x8] sm:$0xff]
    %v112 = vld [vmem:[%s2 + $0x10] sm:$0xff]
    %v113 = vld [vmem:[%s2 + $0x18] sm:$0xff]
    %vm114 = vcmask 261120
    %v116 = vsel %vm114, 0.0, 0
    %118 = vmatprep.subr.mxu0 0.0
    %119 = vmatpush1.msra.mxu0 %v110
    %120 = vmatprep.subr.mxu0 0.0
    %121 = vmatpush1.msra.mxu0 %v111
    %122 = vmatprep.subr.mxu0 0.0
    %123 = vmatpush1.msra.mxu0 %v112
    %124 = vmatprep.subr.mxu0 0.0
    %125 = vmatpush1.msra.mxu0 %v113
    %126 = vmatprep.subr.mxu0 0.0
    %127 = vmatpush1.msra.mxu0 0.0
    %128 = vmatprep.subr.mxu0 0.0
    %129 = vmatpush1.msra.mxu0 0.0
    %130 = vmatprep.subr.mxu0 0.0
    %131 = vmatpush1.msra.mxu0 0.0
    %132 = vmatprep.subr.mxu0 0.0
    %133 = vmatpush1.msra.mxu0 0.0
    %134 = vmatprep.subr.mxu0 0.0
    %135 = vmatpush1.msra.mxu0 0.0
    %136 = vmatprep.subr.mxu0 0.0
    %137 = vmatpush1.msra.mxu0 0.0
    %138 = vmatprep.subr.mxu0 0.0
    %139 = vmatpush1.msra.mxu0 0.0
    %140 = vmatprep.subr.mxu0 0.0
    %141 = vmatpush1.msra.mxu0 0.0
    %142 = vmatprep.subr.mxu0 0.0
    %143 = vmatpush1.msra.mxu0 0.0
    %144 = vmatprep.subr.mxu0 0.0
    %145 = vmatpush1.msra.mxu0 0.0
    %146 = vmatprep.subr.mxu0 0.0
    %147 = vmatpush1.msra.mxu0 0.0
    %148 = vmatprep.subr.mxu0 0.0
    %149 = vmatpush1.msra.mxu0 0.0
    %150 = vmatprep.subr.mxu0 0.0
    %151 = vmatpush1.msra.mxu0 0.0
    %152 = vmatprep.subr.mxu0 0.0
    %153 = vmatpush1.msra.mxu0 0.0
    %154 = vmatprep.subr.mxu0 0.0
    %155 = vmatpush1.msra.mxu0 0.0
    %156 = vmatprep.subr.mxu0 0.0
    %157 = vmatpush1.msra.mxu0 0.0
    %158 = vmatprep.subr.mxu0 0.0
    %159 = vmatpush1.msra.mxu0 0.0
    %160 = vmatprep.subr.mxu0 0.0
    %161 = vmatpush1.msra.mxu0 0.0
    %162 = vmatprep.subr.mxu0 0.0
    %163 = vmatpush1.msra.mxu0 0.0
    %164 = vmatprep.subr.mxu0 0.0
    %165 = vmatpush1.msra.mxu0 0.0
    %166 = vmatprep.subr.mxu0 0.0
    %167 = vmatpush1.msra.mxu0 0.0
    %168 = vmatprep.subr.mxu0 0.0
    %169 = vmatpush1.msra.mxu0 0.0
    %170 = vmatprep.subr.mxu0 0.0
    %171 = vmatpush1.msra.mxu0 0.0
    %172 = vmatprep.subr.mxu0 0.0
    %173 = vmatpush1.msra.mxu0 0.0
    %174 = vmatprep.subr.mxu0 0.0
    %175 = vmatpush1.msra.mxu0 0.0
    %176 = vmatprep.subr.mxu0 0.0
    %177 = vmatpush1.msra.mxu0 0.0
    %178 = vmatprep.subr.mxu0 0.0
    %179 = vmatpush1.msra.mxu0 0.0
    %180 = vmatprep.subr.mxu0 0.0
    %181 = vmatpush1.msra.mxu0 0.0
    %182 = vmatprep.mubr.f32.mxu0 0.0
    %183 = vmatmul.mubr.f32.gmra.mrb[0].mxu0 %v116
    %v184 = vpop.f32.mrb[0].mxu0
    %v185 = vadd.f32 0.0, %v184
    %v186 = vpop.f32.mrb[0].mxu0
    %187 = vdwg.mxu0
    %v188 = vadd.f32 %v102, %v185
    %v189 = vxor.u32 %v188, 2147483648
    %v190 = vmul.f32 %v189, 1.442695
    %v191 = vpow.pop %v190
    %v192 = vadd.f32 %v191, 1.0
    %v193 = vrcp.pop %v192
    %v194 = vmul.f32 1.0, %v193
    %v195 = vtanh.pop %v188
    %v196 = vmul.f32 %v194, 0.0
    %198 = vrot.lane.b32.xlu0 %v195, 32
    %v199 = vpop.permute.xlu0 %198
    %v201 = vmul.f32 %v194, %v199
    %203 = vrot.lane.b32.xlu0 %v201, 32
    %v204 = vpop.permute.xlu0 %203
    %v206 = vadd.f32 %v196, %v204
    %v207 = vtanh.pop %v206
    %209 = vrot.lane.b32.xlu0 %v207, 32
    %v210 = vpop.permute.xlu0 %209
    %v212 = vmul.f32 %v194, %v210
    %214 = vrot.lane.b32.xlu0 %v212, 64
    %v215 = vpop.permute.xlu0 %214
    %v216 = vsel %vm114, %v215, 0
    %218 = vmatprep.subr.mxu0 0.0
    %219 = vmatpush1.msra.mxu0 %v110
    %220 = vmatprep.subr.mxu0 0.0
    %221 = vmatpush1.msra.mxu0 %v111
    %222 = vmatprep.subr.mxu0 0.0
    %223 = vmatpush1.msra.mxu0 %v112
    %224 = vmatprep.subr.mxu0 0.0
    %225 = vmatpush1.msra.mxu0 %v113
    %226 = vmatprep.subr.mxu0 0.0
    %227 = vmatpush1.msra.mxu0 0.0
    %228 = vmatprep.subr.mxu0 0.0
    %229 = vmatpush1.msra.mxu0 0.0
    %230 = vmatprep.subr.mxu0 0.0
    %231 = vmatpush1.msra.mxu0 0.0
    %232 = vmatprep.subr.mxu0 0.0
    %233 = vmatpush1.msra.mxu0 0.0
    %234 = vmatprep.subr.mxu0 0.0
    %235 = vmatpush1.msra.mxu0 0.0
    %236 = vmatprep.subr.mxu0 0.0
    %237 = vmatpush1.msra.mxu0 0.0
    %238 = vmatprep.subr.mxu0 0.0
    %239 = vmatpush1.msra.mxu0 0.0
    %240 = vmatprep.subr.mxu0 0.0
    %241 = vmatpush1.msra.mxu0 0.0
    %242 = vmatprep.subr.mxu0 0.0
    %243 = vmatpush1.msra.mxu0 0.0
    %244 = vmatprep.subr.mxu0 0.0
    %245 = vmatpush1.msra.mxu0 0.0
    %246 = vmatprep.subr.mxu0 0.0
    %247 = vmatpush1.msra.mxu0 0.0
    %248 = vmatprep.subr.mxu0 0.0
    %249 = vmatpush1.msra.mxu0 0.0
    %250 = vmatprep.subr.mxu0 0.0
    %251 = vmatpush1.msra.mxu0 0.0
    %252 = vmatprep.subr.mxu0 0.0
    %253 = vmatpush1.msra.mxu0 0.0
    %254 = vmatprep.subr.mxu0 0.0
    %255 = vmatpush1.msra.mxu0 0.0
    %256 = vmatprep.subr.mxu0 0.0
    %257 = vmatpush1.msra.mxu0 0.0
    %258 = vmatprep.subr.mxu0 0.0
    %259 = vmatpush1.msra.mxu0 0.0
    %260 = vmatprep.subr.mxu0 0.0
    %261 = vmatpush1.msra.mxu0 0.0
    %262 = vmatprep.subr.mxu0 0.0
    %263 = vmatpush1.msra.mxu0 0.0
    %264 = vmatprep.subr.mxu0 0.0
    %265 = vmatpush1.msra.mxu0 0.0
    %266 = vmatprep.subr.mxu0 0.0
    %267 = vmatpush1.msra.mxu0 0.0
    %268 = vmatprep.subr.mxu0 0.0
    %269 = vmatpush1.msra.mxu0 0.0
    %270 = vmatprep.subr.mxu0 0.0
    %271 = vmatpush1.msra.mxu0 0.0
    %272 = vmatprep.subr.mxu0 0.0
    %273 = vmatpush1.msra.mxu0 0.0
    %274 = vmatprep.subr.mxu0 0.0
    %275 = vmatpush1.msra.mxu0 0.0
    %276 = vmatprep.subr.mxu0 0.0
    %277 = vmatpush1.msra.mxu0 0.0
    %278 = vmatprep.subr.mxu0 0.0
    %279 = vmatpush1.msra.mxu0 0.0
    %280 = vmatprep.subr.mxu0 0.0
    %281 = vmatpush1.msra.mxu0 0.0
    %282 = vmatprep.mubr.f32.mxu0 0.0
    %283 = vmatmul.mubr.f32.gmra.mrb[0].mxu0 %v216
    %v284 = vpop.f32.mrb[0].mxu0
    %v285 = vadd.f32 0.0, %v284
    %v286 = vpop.f32.mrb[0].mxu0
    %287 = vdwg.mxu0
    %v289 = vrot.slane %v285, 6
    %v291 = vadd.f32 %v102, %v289
    %v292 = vxor.u32 %v291, 2147483648
    %v293 = vmul.f32 %v292, 1.442695
    %v294 = vpow.pop %v293
    %v295 = vadd.f32 %v294, 1.0
    %v296 = vrcp.pop %v295
    %v297 = vmul.f32 1.0, %v296
    %v298 = vtanh.pop %v291
    %v300 = vrot.slane %v206, 6
    %v302 = vmul.f32 %v297, %v300
    %304 = vrot.lane.b32.xlu0 %v298, 32
    %v305 = vpop.permute.xlu0 %304
    %v307 = vmul.f32 %v297, %v305
    %309 = vrot.lane.b32.xlu0 %v307, 32
    %v310 = vpop.permute.xlu0 %309
    %v312 = vadd.f32 %v302, %v310
    %v313 = vtanh.pop %v312
    %315 = vrot.lane.b32.xlu0 %v313, 32
    %v316 = vpop.permute.xlu0 %315
    %v318 = vmul.f32 %v297, %v316
    %v320 = vrot.slane %v318, 2
    %321 = vrot.lane.b32.xlu0 %v320, 64
    %v322 = vpop.permute.xlu0 %321
    %v323 = vsel %vm114, %v322, 0
    %325 = vmatprep.subr.mxu0 0.0
    %326 = vmatpush1.msra.mxu0 %v110
    %327 = vmatprep.subr.mxu0 0.0
    %328 = vmatpush1.msra.mxu0 %v111
    %329 = vmatprep.subr.mxu0 0.0
    %330 = vmatpush1.msra.mxu0 %v112
    %331 = vmatprep.subr.mxu0 0.0
    %332 = vmatpush1.msra.mxu0 %v113
    %333 = vmatprep.subr.mxu0 0.0
    %334 = vmatpush1.msra.mxu0 0.0
    %335 = vmatprep.subr.mxu0 0.0
    %336 = vmatpush1.msra.mxu0 0.0
    %337 = vmatprep.subr.mxu0 0.0
    %338 = vmatpush1.msra.mxu0 0.0
    %339 = vmatprep.subr.mxu0 0.0
    %340 = vmatpush1.msra.mxu0 0.0
    %341 = vmatprep.subr.mxu0 0.0
    %342 = vmatpush1.msra.mxu0 0.0
    %343 = vmatprep.subr.mxu0 0.0
    %344 = vmatpush1.msra.mxu0 0.0
    %345 = vmatprep.subr.mxu0 0.0
    %346 = vmatpush1.msra.mxu0 0.0
    %347 = vmatprep.subr.mxu0 0.0
    %348 = vmatpush1.msra.mxu0 0.0
    %349 = vmatprep.subr.mxu0 0.0
    %350 = vmatpush1.msra.mxu0 0.0
    %351 = vmatprep.subr.mxu0 0.0
    %352 = vmatpush1.msra.mxu0 0.0
    %353 = vmatprep.subr.mxu0 0.0
    %354 = vmatpush1.msra.mxu0 0.0
    %355 = vmatprep.subr.mxu0 0.0
    %356 = vmatpush1.msra.mxu0 0.0
    %357 = vmatprep.subr.mxu0 0.0
    %358 = vmatpush1.msra.mxu0 0.0
    %359 = vmatprep.subr.mxu0 0.0
    %360 = vmatpush1.msra.mxu0 0.0
    %361 = vmatprep.subr.mxu0 0.0
    %362 = vmatpush1.msra.mxu0 0.0
    %363 = vmatprep.subr.mxu0 0.0
    %364 = vmatpush1.msra.mxu0 0.0
    %365 = vmatprep.subr.mxu0 0.0
    %366 = vmatpush1.msra.mxu0 0.0
    %367 = vmatprep.subr.mxu0 0.0
    %368 = vmatpush1.msra.mxu0 0.0
    %369 = vmatprep.subr.mxu0 0.0
    %370 = vmatpush1.msra.mxu0 0.0
    %371 = vmatprep.subr.mxu0 0.0
    %372 = vmatpush1.msra.mxu0 0.0
    %373 = vmatprep.subr.mxu0 0.0
    %374 = vmatpush1.msra.mxu0 0.0
    %375 = vmatprep.subr.mxu0 0.0
    %376 = vmatpush1.msra.mxu0 0.0
    %377 = vmatprep.subr.mxu0 0.0
    %378 = vmatpush1.msra.mxu0 0.0
    %379 = vmatprep.subr.mxu0 0.0
    %380 = vmatpush1.msra.mxu0 0.0
    %381 = vmatprep.subr.mxu0 0.0
    %382 = vmatpush1.msra.mxu0 0.0
    %383 = vmatprep.subr.mxu0 0.0
    %384 = vmatpush1.msra.mxu0 0.0
    %385 = vmatprep.subr.mxu0 0.0
    %386 = vmatpush1.msra.mxu0 0.0
    %387 = vmatprep.subr.mxu0 0.0
    %388 = vmatpush1.msra.mxu0 0.0
    %389 = vmatprep.mubr.f32.mxu0 0.0
    %390 = vmatmul.mubr.f32.gmra.mrb[0].mxu0 %v323
    %v391 = vpop.f32.mrb[0].mxu0
    %v392 = vadd.f32 0.0, %v391
    %v393 = vpop.f32.mrb[0].mxu0
    %394 = vdwg.mxu0
    %v396 = vrot.slane %v392, 4
    %v398 = vadd.f32 %v102, %v396
    %v399 = vxor.u32 %v398, 2147483648
    %v400 = vmul.f32 %v399, 1.442695
    %v401 = vpow.pop %v400
    %v402 = vadd.f32 %v401, 1.0
    %v403 = vrcp.pop %v402
    %v404 = vmul.f32 1.0, %v403
    %v405 = vtanh.pop %v398
    %v407 = vrot.slane %v312, 6
    %v409 = vmul.f32 %v404, %v407
    %411 = vrot.lane.b32.xlu0 %v405, 32
    %v412 = vpop.permute.xlu0 %411
    %v414 = vmul.f32 %v404, %v412
    %416 = vrot.lane.b32.xlu0 %v414, 32
    %v417 = vpop.permute.xlu0 %416
    %v419 = vadd.f32 %v409, %v417
    %v420 = vtanh.pop %v419
    %422 = vrot.lane.b32.xlu0 %v420, 32
    %v423 = vpop.permute.xlu0 %422
    %v425 = vmul.f32 %v404, %v423
    %v427 = vrot.slane %v425, 4
    %428 = vrot.lane.b32.xlu0 %v427, 64
    %v429 = vpop.permute.xlu0 %428
    %v430 = vsel %vm114, %v429, 0
    %432 = vmatprep.subr.mxu0 0.0
    %433 = vmatpush1.msra.mxu0 %v110
    %434 = vmatprep.subr.mxu0 0.0
    %435 = vmatpush1.msra.mxu0 %v111
    %436 = vmatprep.subr.mxu0 0.0
    %437 = vmatpush1.msra.mxu0 %v112
    %438 = vmatprep.subr.mxu0 0.0
    %439 = vmatpush1.msra.mxu0 %v113
    %440 = vmatprep.subr.mxu0 0.0
    %441 = vmatpush1.msra.mxu0 0.0
    %442 = vmatprep.subr.mxu0 0.0
    %443 = vmatpush1.msra.mxu0 0.0
    %444 = vmatprep.subr.mxu0 0.0
    %445 = vmatpush1.msra.mxu0 0.0
    %446 = vmatprep.subr.mxu0 0.0
    %447 = vmatpush1.msra.mxu0 0.0
    %448 = vmatprep.subr.mxu0 0.0
    %449 = vmatpush1.msra.mxu0 0.0
    %450 = vmatprep.subr.mxu0 0.0
    %451 = vmatpush1.msra.mxu0 0.0
    %452 = vmatprep.subr.mxu0 0.0
    %453 = vmatpush1.msra.mxu0 0.0
    %454 = vmatprep.subr.mxu0 0.0
    %455 = vmatpush1.msra.mxu0 0.0
    %456 = vmatprep.subr.mxu0 0.0
    %457 = vmatpush1.msra.mxu0 0.0
    %458 = vmatprep.subr.mxu0 0.0
    %459 = vmatpush1.msra.mxu0 0.0
    %460 = vmatprep.subr.mxu0 0.0
    %461 = vmatpush1.msra.mxu0 0.0
    %462 = vmatprep.subr.mxu0 0.0
    %463 = vmatpush1.msra.mxu0 0.0
    %464 = vmatprep.subr.mxu0 0.0
    %465 = vmatpush1.msra.mxu0 0.0
    %466 = vmatprep.subr.mxu0 0.0
    %467 = vmatpush1.msra.mxu0 0.0
    %468 = vmatprep.subr.mxu0 0.0
    %469 = vmatpush1.msra.mxu0 0.0
    %470 = vmatprep.subr.mxu0 0.0
    %471 = vmatpush1.msra.mxu0 0.0
    %472 = vmatprep.subr.mxu0 0.0
    %473 = vmatpush1.msra.mxu0 0.0
    %474 = vmatprep.subr.mxu0 0.0
    %475 = vmatpush1.msra.mxu0 0.0
    %476 = vmatprep.subr.mxu0 0.0
    %477 = vmatpush1.msra.mxu0 0.0
    %478 = vmatprep.subr.mxu0 0.0
    %479 = vmatpush1.msra.mxu0 0.0
    %480 = vmatprep.subr.mxu0 0.0
    %481 = vmatpush1.msra.mxu0 0.0
    %482 = vmatprep.subr.mxu0 0.0
    %483 = vmatpush1.msra.mxu0 0.0
    %484 = vmatprep.subr.mxu0 0.0
    %485 = vmatpush1.msra.mxu0 0.0
    %486 = vmatprep.subr.mxu0 0.0
    %487 = vmatpush1.msra.mxu0 0.0
    %488 = vmatprep.subr.mxu0 0.0
    %489 = vmatpush1.msra.mxu0 0.0
    %490 = vmatprep.subr.mxu0 0.0
    %491 = vmatpush1.msra.mxu0 0.0
    %492 = vmatprep.subr.mxu0 0.0
    %493 = vmatpush1.msra.mxu0 0.0
    %494 = vmatprep.subr.mxu0 0.0
    %495 = vmatpush1.msra.mxu0 0.0
    %496 = vmatprep.mubr.f32.mxu0 0.0
    %497 = vmatmul.mubr.f32.gmra.mrb[0].mxu0 %v430
    %v498 = vpop.f32.mrb[0].mxu0
    %v499 = vadd.f32 0.0, %v498
    %v500 = vpop.f32.mrb[0].mxu0
    %501 = vdwg.mxu0
    %v503 = vrot.slane %v499, 2
    %v505 = vadd.f32 %v102, %v503
    %v506 = vxor.u32 %v505, 2147483648
    %v507 = vmul.f32 %v506, 1.442695
    %v508 = vpow.pop %v507
    %v509 = vadd.f32 %v508, 1.0
    %v510 = vrcp.pop %v509
    %v511 = vmul.f32 1.0, %v510
    %v512 = vtanh.pop %v505
    %v514 = vrot.slane %v419, 6
    %v516 = vmul.f32 %v511, %v514
    %518 = vrot.lane.b32.xlu0 %v512, 32
    %v519 = vpop.permute.xlu0 %518
    %v521 = vmul.f32 %v511, %v519
    %523 = vrot.lane.b32.xlu0 %v521, 32
    %v524 = vpop.permute.xlu0 %523
    %v526 = vadd.f32 %v516, %v524
    %v527 = vtanh.pop %v526
    %529 = vrot.lane.b32.xlu0 %v527, 32
    %v530 = vpop.permute.xlu0 %529
    %v532 = vmul.f32 %v511, %v530
    %v534 = vrot.slane %v532, 6
    %535 = vrot.lane.b32.xlu0 %v534, 64
    %v536 = vpop.permute.xlu0 %535
    %v537 = vsel %vm114, %v536, 0
    %539 = vmatprep.subr.mxu0 0.0
    %540 = vmatpush1.msra.mxu0 %v110
    %541 = vmatprep.subr.mxu0 0.0
    %542 = vmatpush1.msra.mxu0 %v111
    %543 = vmatprep.subr.mxu0 0.0
    %544 = vmatpush1.msra.mxu0 %v112
    %545 = vmatprep.subr.mxu0 0.0
    %546 = vmatpush1.msra.mxu0 %v113
    %547 = vmatprep.subr.mxu0 0.0
    %548 = vmatpush1.msra.mxu0 0.0
    %549 = vmatprep.subr.mxu0 0.0
    %550 = vmatpush1.msra.mxu0 0.0
    %551 = vmatprep.subr.mxu0 0.0
    %552 = vmatpush1.msra.mxu0 0.0
    %553 = vmatprep.subr.mxu0 0.0
    %554 = vmatpush1.msra.mxu0 0.0
    %555 = vmatprep.subr.mxu0 0.0
    %556 = vmatpush1.msra.mxu0 0.0
    %557 = vmatprep.subr.mxu0 0.0
    %558 = vmatpush1.msra.mxu0 0.0
    %559 = vmatprep.subr.mxu0 0.0
    %560 = vmatpush1.msra.mxu0 0.0
    %561 = vmatprep.subr.mxu0 0.0
    %562 = vmatpush1.msra.mxu0 0.0
    %563 = vmatprep.subr.mxu0 0.0
    %564 = vmatpush1.msra.mxu0 0.0
    %565 = vmatprep.subr.mxu0 0.0
    %566 = vmatpush1.msra.mxu0 0.0
    %567 = vmatprep.subr.mxu0 0.0
    %568 = vmatpush1.msra.mxu0 0.0
    %569 = vmatprep.subr.mxu0 0.0
    %570 = vmatpush1.msra.mxu0 0.0
    %571 = vmatprep.subr.mxu0 0.0
    %572 = vmatpush1.msra.mxu0 0.0
    %573 = vmatprep.subr.mxu0 0.0
    %574 = vmatpush1.msra.mxu0 0.0
    %575 = vmatprep.subr.mxu0 0.0
    %576 = vmatpush1.msra.mxu0 0.0
    %577 = vmatprep.subr.mxu0 0.0
    %578 = vmatpush1.msra.mxu0 0.0
    %579 = vmatprep.subr.mxu0 0.0
    %580 = vmatpush1.msra.mxu0 0.0
    %581 = vmatprep.subr.mxu0 0.0
    %582 = vmatpush1.msra.mxu0 0.0
    %583 = vmatprep.subr.mxu0 0.0
    %584 = vmatpush1.msra.mxu0 0.0
    %585 = vmatprep.subr.mxu0 0.0
    %586 = vmatpush1.msra.mxu0 0.0
    %587 = vmatprep.subr.mxu0 0.0
    %588 = vmatpush1.msra.mxu0 0.0
    %589 = vmatprep.subr.mxu0 0.0
    %590 = vmatpush1.msra.mxu0 0.0
    %591 = vmatprep.subr.mxu0 0.0
    %592 = vmatpush1.msra.mxu0 0.0
    %593 = vmatprep.subr.mxu0 0.0
    %594 = vmatpush1.msra.mxu0 0.0
    %595 = vmatprep.subr.mxu0 0.0
    %596 = vmatpush1.msra.mxu0 0.0
    %597 = vmatprep.subr.mxu0 0.0
    %598 = vmatpush1.msra.mxu0 0.0
    %599 = vmatprep.subr.mxu0 0.0
    %600 = vmatpush1.msra.mxu0 0.0
    %601 = vmatprep.subr.mxu0 0.0
    %602 = vmatpush1.msra.mxu0 0.0
    %603 = vmatprep.mubr.f32.mxu0 0.0
    %604 = vmatmul.mubr.f32.gmra.mrb[0].mxu0 %v537
    %v605 = vpop.f32.mrb[0].mxu0
    %v606 = vadd.f32 0.0, %v605
    %v607 = vpop.f32.mrb[0].mxu0
    %608 = vdwg.mxu0
    %v609 = vadd.f32 %v107, %v606
    %v610 = vxor.u32 %v609, 2147483648
    %v611 = vmul.f32 %v610, 1.442695
    %v612 = vpow.pop %v611
    %v613 = vadd.f32 %v612, 1.0
    %v614 = vrcp.pop %v613
    %v615 = vmul.f32 1.0, %v614
    %v616 = vtanh.pop %v609
    %v618 = vrot.slane %v526, 6
    %v620 = vmul.f32 %v615, %v618
    %622 = vrot.lane.b32.xlu0 %v616, 32
    %v623 = vpop.permute.xlu0 %622
    %v625 = vmul.f32 %v615, %v623
    %627 = vrot.lane.b32.xlu0 %v625, 32
    %v628 = vpop.permute.xlu0 %627
    %v630 = vadd.f32 %v620, %v628
    %v631 = vtanh.pop %v630
    %633 = vrot.lane.b32.xlu0 %v631, 32
    %v634 = vpop.permute.xlu0 %633
    %v636 = vmul.f32 %v615, %v634
    %638 = vrot.lane.b32.xlu0 %v636, 64
    %v639 = vpop.permute.xlu0 %638
    %v640 = vsel %vm114, %v639, 0
    %642 = vmatprep.subr.mxu0 0.0
    %643 = vmatpush1.msra.mxu0 %v110
    %644 = vmatprep.subr.mxu0 0.0
    %645 = vmatpush1.msra.mxu0 %v111
    %646 = vmatprep.subr.mxu0 0.0
    %647 = vmatpush1.msra.mxu0 %v112
    %648 = vmatprep.subr.mxu0 0.0
    %649 = vmatpush1.msra.mxu0 %v113
    %650 = vmatprep.subr.mxu0 0.0
    %651 = vmatpush1.msra.mxu0 0.0
    %652 = vmatprep.subr.mxu0 0.0
    %653 = vmatpush1.msra.mxu0 0.0
    %654 = vmatprep.subr.mxu0 0.0
    %655 = vmatpush1.msra.mxu0 0.0
    %656 = vmatprep.subr.mxu0 0.0
    %657 = vmatpush1.msra.mxu0 0.0
    %658 = vmatprep.subr.mxu0 0.0
    %659 = vmatpush1.msra.mxu0 0.0
    %660 = vmatprep.subr.mxu0 0.0
    %661 = vmatpush1.msra.mxu0 0.0
    %662 = vmatprep.subr.mxu0 0.0
    %663 = vmatpush1.msra.mxu0 0.0
    %664 = vmatprep.subr.mxu0 0.0
    %665 = vmatpush1.msra.mxu0 0.0
    %666 = vmatprep.subr.mxu0 0.0
    %667 = vmatpush1.msra.mxu0 0.0
    %668 = vmatprep.subr.mxu0 0.0
    %669 = vmatpush1.msra.mxu0 0.0
    %670 = vmatprep.subr.mxu0 0.0
    %671 = vmatpush1.msra.mxu0 0.0
    %672 = vmatprep.subr.mxu0 0.0
    %673 = vmatpush1.msra.mxu0 0.0
    %674 = vmatprep.subr.mxu0 0.0
    %675 = vmatpush1.msra.mxu0 0.0
    %676 = vmatprep.subr.mxu0 0.0
    %677 = vmatpush1.msra.mxu0 0.0
    %678 = vmatprep.subr.mxu0 0.0
    %679 = vmatpush1.msra.mxu0 0.0
    %680 = vmatprep.subr.mxu0 0.0
    %681 = vmatpush1.msra.mxu0 0.0
    %682 = vmatprep.subr.mxu0 0.0
    %683 = vmatpush1.msra.mxu0 0.0
    %684 = vmatprep.subr.mxu0 0.0
    %685 = vmatpush1.msra.mxu0 0.0
    %686 = vmatprep.subr.mxu0 0.0
    %687 = vmatpush1.msra.mxu0 0.0
    %688 = vmatprep.subr.mxu0 0.0
    %689 = vmatpush1.msra.mxu0 0.0
    %690 = vmatprep.subr.mxu0 0.0
    %691 = vmatpush1.msra.mxu0 0.0
    %692 = vmatprep.subr.mxu0 0.0
    %693 = vmatpush1.msra.mxu0 0.0
    %694 = vmatprep.subr.mxu0 0.0
    %695 = vmatpush1.msra.mxu0 0.0
    %696 = vmatprep.subr.mxu0 0.0
    %697 = vmatpush1.msra.mxu0 0.0
    %698 = vmatprep.subr.mxu0 0.0
    %699 = vmatpush1.msra.mxu0 0.0
    %700 = vmatprep.subr.mxu0 0.0
    %701 = vmatpush1.msra.mxu0 0.0
    %702 = vmatprep.subr.mxu0 0.0
    %703 = vmatpush1.msra.mxu0 0.0
    %704 = vmatprep.subr.mxu0 0.0
    %705 = vmatpush1.msra.mxu0 0.0
    %706 = vmatprep.mubr.f32.mxu0 0.0
    %707 = vmatmul.mubr.f32.gmra.mrb[0].mxu0 %v640
    %v708 = vpop.f32.mrb[0].mxu0
    %v709 = vadd.f32 0.0, %v708
    %v710 = vpop.f32.mrb[0].mxu0
    %711 = vdwg.mxu0
    %v713 = vrot.slane %v709, 6
    %v715 = vadd.f32 %v107, %v713
    %v716 = vxor.u32 %v715, 2147483648
    %v717 = vmul.f32 %v716, 1.442695
    %v718 = vpow.pop %v717
    %v719 = vadd.f32 %v718, 1.0
    %v720 = vrcp.pop %v719
    %v721 = vmul.f32 1.0, %v720
    %v722 = vtanh.pop %v715
    %v724 = vrot.slane %v630, 6
    %v726 = vmul.f32 %v721, %v724
    %728 = vrot.lane.b32.xlu0 %v722, 32
    %v729 = vpop.permute.xlu0 %728
    %v731 = vmul.f32 %v721, %v729
    %733 = vrot.lane.b32.xlu0 %v731, 32
    %v734 = vpop.permute.xlu0 %733
    %v736 = vadd.f32 %v726, %v734
    %v737 = vtanh.pop %v736
    %739 = vrot.lane.b32.xlu0 %v737, 32
    %v740 = vpop.permute.xlu0 %739
    %v742 = vmul.f32 %v721, %v740
    %v744 = vrot.slane %v742, 2
    %745 = vrot.lane.b32.xlu0 %v744, 64
    %v746 = vpop.permute.xlu0 %745
    %v747 = vsel %vm114, %v746, 0
    %749 = vmatprep.subr.mxu0 0.0
    %750 = vmatpush1.msra.mxu0 %v110
    %751 = vmatprep.subr.mxu0 0.0
    %752 = vmatpush1.msra.mxu0 %v111
    %753 = vmatprep.subr.mxu0 0.0
    %754 = vmatpush1.msra.mxu0 %v112
    %755 = vmatprep.subr.mxu0 0.0
    %756 = vmatpush1.msra.mxu0 %v113
    %757 = vmatprep.subr.mxu0 0.0
    %758 = vmatpush1.msra.mxu0 0.0
    %759 = vmatprep.subr.mxu0 0.0
    %760 = vmatpush1.msra.mxu0 0.0
    %761 = vmatprep.subr.mxu0 0.0
    %762 = vmatpush1.msra.mxu0 0.0
    %763 = vmatprep.subr.mxu0 0.0
    %764 = vmatpush1.msra.mxu0 0.0
    %765 = vmatprep.subr.mxu0 0.0
    %766 = vmatpush1.msra.mxu0 0.0
    %767 = vmatprep.subr.mxu0 0.0
    %768 = vmatpush1.msra.mxu0 0.0
    %769 = vmatprep.subr.mxu0 0.0
    %770 = vmatpush1.msra.mxu0 0.0
    %771 = vmatprep.subr.mxu0 0.0
    %772 = vmatpush1.msra.mxu0 0.0
    %773 = vmatprep.subr.mxu0 0.0
    %774 = vmatpush1.msra.mxu0 0.0
    %775 = vmatprep.subr.mxu0 0.0
    %776 = vmatpush1.msra.mxu0 0.0
    %777 = vmatprep.subr.mxu0 0.0
    %778 = vmatpush1.msra.mxu0 0.0
    %779 = vmatprep.subr.mxu0 0.0
    %780 = vmatpush1.msra.mxu0 0.0
    %781 = vmatprep.subr.mxu0 0.0
    %782 = vmatpush1.msra.mxu0 0.0
    %783 = vmatprep.subr.mxu0 0.0
    %784 = vmatpush1.msra.mxu0 0.0
    %785 = vmatprep.subr.mxu0 0.0
    %786 = vmatpush1.msra.mxu0 0.0
    %787 = vmatprep.subr.mxu0 0.0
    %788 = vmatpush1.msra.mxu0 0.0
    %789 = vmatprep.subr.mxu0 0.0
    %790 = vmatpush1.msra.mxu0 0.0
    %791 = vmatprep.subr.mxu0 0.0
    %792 = vmatpush1.msra.mxu0 0.0
    %793 = vmatprep.subr.mxu0 0.0
    %794 = vmatpush1.msra.mxu0 0.0
    %795 = vmatprep.subr.mxu0 0.0
    %796 = vmatpush1.msra.mxu0 0.0
    %797 = vmatprep.subr.mxu0 0.0
    %798 = vmatpush1.msra.mxu0 0.0
    %799 = vmatprep.subr.mxu0 0.0
    %800 = vmatpush1.msra.mxu0 0.0
    %801 = vmatprep.subr.mxu0 0.0
    %802 = vmatpush1.msra.mxu0 0.0
    %803 = vmatprep.subr.mxu0 0.0
    %804 = vmatpush1.msra.mxu0 0.0
    %805 = vmatprep.subr.mxu0 0.0
    %806 = vmatpush1.msra.mxu0 0.0
    %807 = vmatprep.subr.mxu0 0.0
    %808 = vmatpush1.msra.mxu0 0.0
    %809 = vmatprep.subr.mxu0 0.0
    %810 = vmatpush1.msra.mxu0 0.0
    %811 = vmatprep.subr.mxu0 0.0
    %812 = vmatpush1.msra.mxu0 0.0
    %813 = vmatprep.mubr.f32.mxu0 0.0
    %814 = vmatmul.mubr.f32.gmra.mrb[0].mxu0 %v747
    %v815 = vpop.f32.mrb[0].mxu0
    %v816 = vadd.f32 0.0, %v815
    %v817 = vpop.f32.mrb[0].mxu0
    %818 = vdwg.mxu0
    %v820 = vrot.slane %v816, 4
    %v822 = vadd.f32 %v107, %v820
    %v823 = vxor.u32 %v822, 2147483648
    %v824 = vmul.f32 %v823, 1.442695
    %v825 = vpow.pop %v824
    %v826 = vadd.f32 %v825, 1.0
    %v827 = vrcp.pop %v826
    %v828 = vmul.f32 1.0, %v827
    %v829 = vtanh.pop %v822
    %v831 = vrot.slane %v736, 6
    %v833 = vmul.f32 %v828, %v831
    %835 = vrot.lane.b32.xlu0 %v829, 32
    %v836 = vpop.permute.xlu0 %835
    %v838 = vmul.f32 %v828, %v836
    %840 = vrot.lane.b32.xlu0 %v838, 32
    %v841 = vpop.permute.xlu0 %840
    %v843 = vadd.f32 %v833, %v841
    %v844 = vtanh.pop %v843
    %846 = vrot.lane.b32.xlu0 %v844, 32
    %v847 = vpop.permute.xlu0 %846
    %v849 = vmul.f32 %v828, %v847
    %v851 = vrot.slane %v849, 4
    %852 = vrot.lane.b32.xlu0 %v851, 64
    %v853 = vpop.permute.xlu0 %852
    %v854 = vsel %vm114, %v853, 0
    %856 = vmatprep.subr.mxu0 0.0
    %857 = vmatpush1.msra.mxu0 %v110
    %858 = vmatprep.subr.mxu0 0.0
    %859 = vmatpush1.msra.mxu0 %v111
    %860 = vmatprep.subr.mxu0 0.0
    %861 = vmatpush1.msra.mxu0 %v112
    %862 = vmatprep.subr.mxu0 0.0
    %863 = vmatpush1.msra.mxu0 %v113
    %864 = vmatprep.subr.mxu0 0.0
    %865 = vmatpush1.msra.mxu0 0.0
    %866 = vmatprep.subr.mxu0 0.0
    %867 = vmatpush1.msra.mxu0 0.0
    %868 = vmatprep.subr.mxu0 0.0
    %869 = vmatpush1.msra.mxu0 0.0
    %870 = vmatprep.subr.mxu0 0.0
    %871 = vmatpush1.msra.mxu0 0.0
    %872 = vmatprep.subr.mxu0 0.0
    %873 = vmatpush1.msra.mxu0 0.0
    %874 = vmatprep.subr.mxu0 0.0
    %875 = vmatpush1.msra.mxu0 0.0
    %876 = vmatprep.subr.mxu0 0.0
    %877 = vmatpush1.msra.mxu0 0.0
    %878 = vmatprep.subr.mxu0 0.0
    %879 = vmatpush1.msra.mxu0 0.0
    %880 = vmatprep.subr.mxu0 0.0
    %881 = vmatpush1.msra.mxu0 0.0
    %882 = vmatprep.subr.mxu0 0.0
    %883 = vmatpush1.msra.mxu0 0.0
    %884 = vmatprep.subr.mxu0 0.0
    %885 = vmatpush1.msra.mxu0 0.0
    %886 = vmatprep.subr.mxu0 0.0
    %887 = vmatpush1.msra.mxu0 0.0
    %888 = vmatprep.subr.mxu0 0.0
    %889 = vmatpush1.msra.mxu0 0.0
    %890 = vmatprep.subr.mxu0 0.0
    %891 = vmatpush1.msra.mxu0 0.0
    %892 = vmatprep.subr.mxu0 0.0
    %893 = vmatpush1.msra.mxu0 0.0
    %894 = vmatprep.subr.mxu0 0.0
    %895 = vmatpush1.msra.mxu0 0.0
    %896 = vmatprep.subr.mxu0 0.0
    %897 = vmatpush1.msra.mxu0 0.0
    %898 = vmatprep.subr.mxu0 0.0
    %899 = vmatpush1.msra.mxu0 0.0
    %900 = vmatprep.subr.mxu0 0.0
    %901 = vmatpush1.msra.mxu0 0.0
    %902 = vmatprep.subr.mxu0 0.0
    %903 = vmatpush1.msra.mxu0 0.0
    %904 = vmatprep.subr.mxu0 0.0
    %905 = vmatpush1.msra.mxu0 0.0
    %906 = vmatprep.subr.mxu0 0.0
    %907 = vmatpush1.msra.mxu0 0.0
    %908 = vmatprep.subr.mxu0 0.0
    %909 = vmatpush1.msra.mxu0 0.0
    %910 = vmatprep.subr.mxu0 0.0
    %911 = vmatpush1.msra.mxu0 0.0
    %912 = vmatprep.subr.mxu0 0.0
    %913 = vmatpush1.msra.mxu0 0.0
    %914 = vmatprep.subr.mxu0 0.0
    %915 = vmatpush1.msra.mxu0 0.0
    %916 = vmatprep.subr.mxu0 0.0
    %917 = vmatpush1.msra.mxu0 0.0
    %918 = vmatprep.subr.mxu0 0.0
    %919 = vmatpush1.msra.mxu0 0.0
    %920 = vmatprep.mubr.f32.mxu0 0.0
    %921 = vmatmul.mubr.f32.gmra.mrb[0].mxu0 %v854
    %v922 = vpop.f32.mrb[0].mxu0
    %v923 = vadd.f32 0.0, %v922
    %v924 = vpop.f32.mrb[0].mxu0
    %925 = vdwg.mxu0
    %v927 = vrot.slane %v923, 2
    %v929 = vadd.f32 %v107, %v927
    %v930 = vxor.u32 %v929, 2147483648
    %v931 = vmul.f32 %v930, 1.442695
    %v932 = vpow.pop %v931
    %v933 = vadd.f32 %v932, 1.0
    %v934 = vrcp.pop %v933
    %v935 = vmul.f32 1.0, %v934
    %v936 = vtanh.pop %v929
    %v938 = vrot.slane %v843, 6
    %v940 = vmul.f32 %v935, %v938
    %942 = vrot.lane.b32.xlu0 %v936, 32
    %v943 = vpop.permute.xlu0 %942
    %v945 = vmul.f32 %v935, %v943
    %947 = vrot.lane.b32.xlu0 %v945, 32
    %v948 = vpop.permute.xlu0 %947
    %v950 = vadd.f32 %v940, %v948
    %v951 = vtanh.pop %v950
    %953 = vrot.lane.b32.xlu0 %v951, 32
    %v954 = vpop.permute.xlu0 %953
    %v956 = vmul.f32 %v935, %v954
    %958 = vrot.lane.b32.xlu0 %v320, 96
    %v959 = vpop.permute.xlu0 %958
    %962 = vrot.lane.b32.xlu0 %v534, 32
    %v963 = vpop.permute.xlu0 %962
    %966 = vrot.lane.b32.xlu0 %v744, 96
    %v967 = vpop.permute.xlu0 %966
    %v971 = vrot.slane %v956, 6
    %972 = vrot.lane.b32.xlu0 %v971, 32
    %v973 = vpop.permute.xlu0 %972
    %v975 = vsel %vm114, %v215, %v959
    %vm976 = vcmask 523264
    %v977 = vsel %vm976, %v975, %v427
    %vm978 = vcmask 785408
    %v979 = vsel %vm978, %v977, %v963
    %v980 = vsel %vm114, %v639, %v967
    %v981 = vsel %vm976, %v980, %v851
    %v982 = vsel %vm978, %v981, %v973
    %v985 = vcombine.low %v979, %v982
    %v987 = vunpack.c.l.s4 1983009808
    %v988 = vunpack.c.0.s8 %v987
    %v989 = vlaneseq
    %v990 = vshrl.u32 %v989, 7
    %v991 = vsub.s32 %v988, %v990
    %v992 = vrot.slane %v985, %v991
    %994 = vst [vmem:[#allocation2] sm:$0xf] %v992
    // Predicated region
    $region18: #{_rnn_b_forward_impl.1} parent=1 // pred_check
      _
    $region19: #{_rnn_b_forward_impl.1} parent=1 // pred_check_branch
      %996 = sbr.rel (0) target = $region21
    $region20: #{_rnn_b_forward_impl.1} parent=1 // pred_region
      %s998 = ssub.s32 64, 64
      %999 = vsyncadd [#allocation3], %s998
      %s1001 = sshll.u32 [#allocation2], 4
      %s1002 = int_to_ptr.vmem [resolvable:$true] %s1001
      %1004 = dma.vmem_to_hbm [thread:$0]  %s1002, 64, %s4, [#allocation3]
    $region21: #{_rnn_b_forward_impl.1} parent=1 // pred_fallthru
      _
    // Predicated region
    $region22: #{_rnn_b_forward_impl.1} parent=1 // pred_check
      _
    $region23: #{_rnn_b_forward_impl.1} parent=1 // pred_check_branch
      %1006 = sbr.rel (0) target = $region25
    $region24: #{_rnn_b_forward_impl.1} parent=1 // pred_region
      %1007 = dma.done [#allocation3], 64
    $region25: #{_rnn_b_forward_impl.1} parent=1 // pred_fallthru
      _
    %1008 = vsyncpa [#allocation3], 1

</llo_original>
